<compile_context>
chip_gen: v5e
topology: v5e:2x2
jax: 0.10.0
libtpu: 0.0.40
codegen_flags: <defaults>
</compile_context>

<pallas_src>
import functools

import jax
import jax.numpy as jnp
from jax.experimental import pallas as pl
from jax.experimental.pallas import tpu as pltpu


def _round_up(x: int, m: int) -> int:
    return ((x + m - 1) // m) * m


def _pad_to(a, shape):
    pads = [(0, int(t) - int(s)) for s, t in zip(a.shape, shape)]
    if all(p == (0, 0) for p in pads):
        return a
    return jnp.pad(a, pads)


# -----------------------------------------------------------------------------
# Kernel
# -----------------------------------------------------------------------------
def _attention_kernel(s_len,
                      inp_ref, src_ref, w_cat_ref, b_in_ref, w_out_x_ref,
                      b_out_ref, x_ref, attn_ref):
    """Grid = (batch tiles, S tiles).  Block shapes:
         inp_ref    : (tb, Din_p)           f32
         src_ref    : (tb, Dout_sub, tS)    f32/bf16  (Dout on sublanes, S on lanes)
         w_cat_ref  : (Din_p, 2*Dout_p)     f32   [w_in^T | w_out(input slab)^T]
         b_in_ref   : (1, Dout_p)           f32
         w_out_x_ref: (Dout_p, Dout_p)      f32
         b_out_ref  : (1, Dout_p)           f32
         x_ref      : (tb, Dout_p)          f32   (resident across S tiles)
         attn_ref   : (nS, tb, tS)          f32   (resident across S tiles)
    """
    s_idx = pl.program_id(1)
    n_s = pl.num_programs(1)
    dout_p = w_out_x_ref.shape[0]
    dout_sub = src_ref.shape[1]
    t_s = src_ref.shape[2]

    inp = inp_ref[...]
    # One MXU dot from `input` feeds both input_proj and output_proj's input slab.
    both = jnp.dot(inp, w_cat_ref[...], preferred_element_type=jnp.float32)
    x_lin = both[:, :dout_p] + b_in_ref[...]               # input_proj(input)

    @pl.when(s_idx == 0)
    def _():
        # x = tanh(output_proj(cat([input_proj(input), input], dim=1)))
        out = jnp.dot(x_lin, w_out_x_ref[...],
                      preferred_element_type=jnp.float32)
        out = out + both[:, dout_p:] + b_out_ref[...]
        x_ref[...] = jnp.tanh(out).astype(x_ref.dtype)

    # Score chunk: contract Dout (sublanes of src) against x_lin on the MXU.
    src = src_ref[...]                                     # (tb, Dout_sub, tS)
    x_q = x_lin[:, None, :dout_sub].astype(src.dtype)      # (tb, 1, Dout_sub)
    sc = jnp.einsum('bqd,bds->bqs', x_q, src,
                    preferred_element_type=jnp.float32)[:, 0, :]   # (tb, tS)

    # Mask padded source positions of this chunk so the softmax ignores them.
    col = jax.lax.broadcasted_iota(jnp.int32, sc.shape, 1) + s_idx * t_s
    sc = jnp.where(col < s_len, sc, -jnp.inf)
    attn_ref[s_idx] = sc

    # Last S tile: softmax over the full (resident) score slab.
    @pl.when(s_idx == n_s - 1)
    def _():
        scores = attn_ref[...]                                        # (nS, tb, tS)
        m = jnp.max(jnp.max(scores, axis=0), axis=-1, keepdims=True)  # (tb, 1)
        e = jnp.exp(scores - m[None, :, :])
        denom = jnp.sum(jnp.sum(e, axis=0), axis=-1, keepdims=True)   # (tb, 1)
        attn_ref[...] = e * (1.0 / denom)[None, :, :]                 # exact recip


# -----------------------------------------------------------------------------
# One-time parameter / source preparation (hoisted out of the per-step path)
# -----------------------------------------------------------------------------
def prepare_attention_params(w_in, b_in, w_out, b_out, dtype=jnp.float32):
    """nn.Linear conventions:
         w_in : (Dout, Din)          b_in : (Dout,)
         w_out: (Dout, Dout + Din)   b_out: (Dout,)   (cat order is [x, input])
    Returns (w_cat, b_in, w_out_x, b_out), transposed and 128-padded."""
    dout, din = w_in.shape
    din_p, dout_p = _round_up(din, 128), _round_up(dout, 128)
    w_in = jnp.asarray(w_in, dtype)
    w_out = jnp.asarray(w_out, dtype)
    w_in_t = _pad_to(w_in.T, (din_p, dout_p))                  # multiplies input
    w_out_in_t = _pad_to(w_out[:, dout:].T, (din_p, dout_p))   # multiplies input
    w_cat = jnp.concatenate([w_in_t, w_out_in_t], axis=1)      # (Din_p, 2*Dout_p)
    w_out_x = _pad_to(w_out[:, :dout].T, (dout_p, dout_p))     # multiplies x
    b_in_p = _pad_to(jnp.asarray(b_in, dtype).reshape(1, dout), (1, dout_p))
    b_out_p = _pad_to(jnp.asarray(b_out, dtype).reshape(1, dout), (1, dout_p))
    return w_cat, b_in_p, w_out_x, b_out_p


def prepare_source_hids(source_hids, *, block_b=64, block_s=512,
                        src_dtype=jnp.bfloat16):
    """(S, B, Dout) -> (Bp, Dout_sub, S_pad) kernel-native layout.
    Run ONCE per encoded sequence, NOT once per decode step."""
    assert block_b % 8 == 0 and block_s % 128 == 0
    s_len, b, dout = source_hids.shape
    dout_sub = _round_up(dout, 16)                # bf16 sublane tile
    tb = block_b if b >= block_b else _round_up(b, 8)
    bp = _round_up(b, tb)
    s128 = _round_up(s_len, 128)
    t_s = min(block_s, s128)
    s_pad = _round_up(s128, t_s)
    src = jnp.transpose(source_hids, (1, 2, 0))   # (B, Dout, S)
    return _pad_to(src.astype(src_dtype), (bp, dout_sub, s_pad))


# -----------------------------------------------------------------------------
# Per-decode-step forward
# -----------------------------------------------------------------------------
def attention_step(inp, src_prep, w_cat, b_in, w_out_x, b_out, *,
                   dout, s_len, block_b=64, block_s=512):
    """inp: (B, Din).  src_prep from prepare_source_hids (same block_b/block_s).
    Returns (x (B, Dout), attn_scores (S, B)) matching the PyTorch module."""
    b = inp.shape[0]
    bp, dout_sub, s_pad = src_prep.shape
    din_p = w_cat.shape[0]
    dout_p = w_out_x.shape[0]

    tb = min(block_b, bp)
    t_s = min(block_s, s_pad)
    assert bp % tb == 0 and s_pad % t_s == 0 and tb % 8 == 0 and t_s % 128 == 0
    n_b, n_s = bp // tb, s_pad // t_s

    inp_p = _pad_to(jnp.asarray(inp, jnp.float32), (bp, din_p))

    # VMEM budget: double-buffered blocks + resident weights/outputs + margin.
    itemsize = jnp.dtype(src_prep.dtype).itemsize
    blk_bytes = (tb * dout_sub * t_s * itemsize            # src tile
                 + tb * din_p * 4                          # input tile
                 + tb * dout_p * 4                         # x output block
                 + n_s * tb * t_s * 4                      # attn output block
                 + (din_p * 2 * dout_p + dout_p * dout_p + 2 * dout_p) * 4)
    vmem_limit = int(min(max(2 * blk_bytes + (4 << 20), 32 << 20), 56 << 20))

    kernel = functools.partial(_attention_kernel, s_len)
    x_pad, attn_pad = pl.pallas_call(
        kernel,
        out_shape=(jax.ShapeDtypeStruct((bp, dout_p), jnp.float32),
                   jax.ShapeDtypeStruct((n_s, bp, t_s), jnp.float32)),
        grid=(n_b, n_s),
        in_specs=[
            pl.BlockSpec((tb, din_p), lambda i, s: (i, 0)),             # input
            pl.BlockSpec((tb, dout_sub, t_s), lambda i, s: (i, 0, s)),  # src
            pl.BlockSpec((din_p, 2 * dout_p), lambda i, s: (0, 0)),     # w_cat
            pl.BlockSpec((1, dout_p), lambda i, s: (0, 0)),             # b_in
            pl.BlockSpec((dout_p, dout_p), lambda i, s: (0, 0)),        # w_out_x
            pl.BlockSpec((1, dout_p), lambda i, s: (0, 0)),             # b_out
        ],
        out_specs=(
            pl.BlockSpec((tb, dout_p), lambda i, s: (i, 0)),            # x
            pl.BlockSpec((n_s, tb, t_s), lambda i, s: (0, i, 0)),       # attn
        ),
        compiler_params=pltpu.CompilerParams(
            dimension_semantics=("parallel", "arbitrary"),
            vmem_limit_bytes=vmem_limit,
        ),
    )(inp_p, src_prep, w_cat, b_in, w_out_x, b_out)

    x = x_pad[:b, :dout]
    attn = jnp.transpose(attn_pad, (1, 0, 2)).reshape(bp, n_s * t_s)[:b, :s_len]
    return x, attn.T                       # attn_scores: (S, B), softmax over S


# -----------------------------------------------------------------------------
# Pure-JAX reference (mirrors the PyTorch forward)
# -----------------------------------------------------------------------------
def attention_layer_ref(inp, source_hids, w_in, b_in, w_out, b_out):
    x = inp @ w_in.T + b_in
    attn = jax.nn.softmax(jnp.sum(source_hids * x[None, :, :], axis=2), axis=0)
    out = jnp.tanh(jnp.concatenate([x, inp], axis=1) @ w_out.T + b_out)
    return out, attn


if __name__ == "__main__":
    # Small decoder-ish shapes; S=200 with block_s=128 exercises the tiled-S
    # (masked, chunked-softmax) path, B=4 pads to one 8-row batch tile.
    B, Din, Dout, S = 4, 16, 32, 200

    key = jax.random.PRNGKey(0)
    k_inp, k_src, k_wi, k_bi, k_wo, k_bo = jax.random.split(key, 6)

    inp = jax.random.normal(k_inp, (B, Din), jnp.float32)
    source_hids = jax.random.normal(k_src, (S, B, Dout), jnp.float32)

    # nn.Linear shapes: (out_features, in_features)
    w_in = 0.1 * jax.random.normal(k_wi, (Dout, Din), jnp.float32)
    b_in = 0.1 * jax.random.normal(k_bi, (Dout,), jnp.float32)
    w_out = 0.1 * jax.random.normal(k_wo, (Dout, Din + Dout), jnp.float32)
    b_out = 0.1 * jax.random.normal(k_bo, (Dout,), jnp.float32)

    params = prepare_attention_params(w_in, b_in, w_out, b_out)
    x_expected, attn_expected = attention_layer_ref(
        inp, source_hids, w_in, b_in, w_out, b_out)

    # f32 src path (reference-accurate) and bf16 src path (production config).
    for src_dtype, attn_tol in ((jnp.float32, 2e-2), (jnp.bfloat16, 3e-2)):
        src_prep = prepare_source_hids(source_hids, block_b=8, block_s=128,
                                       src_dtype=src_dtype)
        run = jax.jit(functools.partial(attention_step, dout=Dout, s_len=S,
                                        block_b=8, block_s=128))
        x_out, attn = run(inp, src_prep, *params)
        jax.block_until_ready((x_out, attn))

        assert x_out.shape == (B, Dout) and attn.shape == (S, B)
        assert jnp.allclose(x_out, x_expected, atol=1e-2, rtol=1e-2), "x mismatch"
        assert jnp.allclose(attn, attn_expected, atol=attn_tol, rtol=attn_tol), \
            "attn mismatch"
        assert jnp.allclose(attn.sum(axis=0), jnp.ones((B,)), atol=1e-3)

    print("KERNEL_OK")
</pallas_src>

<mosaic_0001>
module attributes {stable_mosaic.version = 11 : i64} {
  func.func @_attention_kernel(%arg0: i32, %arg1: i32, %arg2: memref<8x128xf32, #tpu.memory_space<vmem>>, %arg3: memref<8x32x128xf32, #tpu.memory_space<vmem>>, %arg4: memref<128x256xf32, #tpu.memory_space<vmem>>, %arg5: memref<1x128xf32, #tpu.memory_space<vmem>>, %arg6: memref<128x128xf32, #tpu.memory_space<vmem>>, %arg7: memref<1x128xf32, #tpu.memory_space<vmem>>, %arg8: memref<8x128xf32, #tpu.memory_space<vmem>>, %arg9: memref<2x8x128xf32, #tpu.memory_space<vmem>>) attributes {dimension_semantics = [#tpu.dimension_semantics<parallel>, #tpu.dimension_semantics<arbitrary>], iteration_bounds = array<i64: 1, 2>, scalar_prefetch = 0 : i64, scratch_operands = 0 : i64, tpu.core_type = #tpu.core_type<tc>, window_params = [{transform_indices = @transform_0, window_bounds = array<i64: 8, 128>}, {transform_indices = @transform_1, window_bounds = array<i64: 8, 32, 128>}, {pipeline_mode = #tpu.pipeline_mode<synchronous>, transform_indices = @transform_2, window_bounds = array<i64: 128, 256>}, {pipeline_mode = #tpu.pipeline_mode<synchronous>, transform_indices = @transform_3, window_bounds = array<i64: 1, 128>}, {pipeline_mode = #tpu.pipeline_mode<synchronous>, transform_indices = @transform_4, window_bounds = array<i64: 128, 128>}, {pipeline_mode = #tpu.pipeline_mode<synchronous>, transform_indices = @transform_5, window_bounds = array<i64: 1, 128>}, {transform_indices = @transform_6, window_bounds = array<i64: 8, 128>}, {transform_indices = @transform_7, window_bounds = array<i64: 2, 8, 128>}]} {
    %c0 = arith.constant 0 : index
    %c0_0 = arith.constant 0 : index
    %0 = vector.load %arg2[%c0, %c0_0] : memref<8x128xf32, #tpu.memory_space<vmem>>, vector<8x128xf32>
    %c0_1 = arith.constant 0 : index
    %c0_2 = arith.constant 0 : index
    %1 = vector.load %arg4[%c0_1, %c0_2] : memref<128x256xf32, #tpu.memory_space<vmem>>, vector<128x256xf32>
    %cst = arith.constant dense<0.000000e+00> : vector<8x256xf32>
    %2 = tpu.matmul %0, %1, %cst {dimension_numbers = #tpu.dot_dimension_numbers<[1], [0], [0], [1], [0, 0, 1, 1], [], []>} : vector<8x128xf32>, vector<128x256xf32>, vector<8x256xf32> -> vector<8x256xf32>
    %3 = vector.extract_strided_slice %2 {offsets = [0, 0], sizes = [8, 128], strides = [1, 1]} : vector<8x256xf32> to vector<8x128xf32>
    %c0_3 = arith.constant 0 : index
    %c0_4 = arith.constant 0 : index
    %4 = vector.load %arg5[%c0_3, %c0_4] : memref<1x128xf32, #tpu.memory_space<vmem>>, vector<1x128xf32>
    %5 = vector.broadcast %4 : vector<1x128xf32> to vector<8x128xf32>
    %6 = arith.addf %3, %5 : vector<8x128xf32>
    %c0_i32 = arith.constant 0 : i32
    %7 = arith.cmpi eq, %arg1, %c0_i32 : i32
    %8 = arith.extui %7 : i1 to i32
    %c0_i32_5 = arith.constant 0 : i32
    %9 = arith.cmpi ne, %8, %c0_i32_5 : i32
    scf.if %9 {
      %c0_14 = arith.constant 0 : index
      %c0_15 = arith.constant 0 : index
      %30 = vector.load %arg6[%c0_14, %c0_15] : memref<128x128xf32, #tpu.memory_space<vmem>>, vector<128x128xf32>
      %cst_16 = arith.constant dense<0.000000e+00> : vector<8x128xf32>
      %31 = tpu.matmul %6, %30, %cst_16 {dimension_numbers = #tpu.dot_dimension_numbers<[1], [0], [0], [1], [0, 0, 1, 1], [], []>} : vector<8x128xf32>, vector<128x128xf32>, vector<8x128xf32> -> vector<8x128xf32>
      %32 = vector.extract_strided_slice %2 {offsets = [0, 128], sizes = [8, 128], strides = [1, 1]} : vector<8x256xf32> to vector<8x128xf32>
      %33 = arith.addf %31, %32 : vector<8x128xf32>
      %c0_17 = arith.constant 0 : index
      %c0_18 = arith.constant 0 : index
      %34 = vector.load %arg7[%c0_17, %c0_18] : memref<1x128xf32, #tpu.memory_space<vmem>>, vector<1x128xf32>
      %35 = vector.broadcast %34 : vector<1x128xf32> to vector<8x128xf32>
      %36 = arith.addf %33, %35 : vector<8x128xf32>
      %37 = math.tanh %36 : vector<8x128xf32>
      %c0_19 = arith.constant 0 : index
      %c0_20 = arith.constant 0 : index
      %38 = vector.load %arg8[%c0_19, %c0_20] : memref<8x128xf32, #tpu.memory_space<vmem>>, vector<8x128xf32>
      tpu.vector_store %arg8[%c0_19, %c0_20], %37 {strides = array<i32>} : memref<8x128xf32, #tpu.memory_space<vmem>>, vector<8x128xf32>,
    } else {
    }
    %c0_6 = arith.constant 0 : index
    %c0_7 = arith.constant 0 : index
    %c0_8 = arith.constant 0 : index
    %10 = vector.load %arg3[%c0_6, %c0_7, %c0_8] : memref<8x32x128xf32, #tpu.memory_space<vmem>>, vector<8x32x128xf32>
    %11 = vector.extract_strided_slice %6 {offsets = [0, 0], sizes = [8, 32], strides = [1, 1]} : vector<8x128xf32> to vector<8x32xf32>
    %12 = vector.shape_cast %11 : vector<8x32xf32> to vector<8x1x32xf32>
    "tpu.trace_start"() <{level = 10 : i32, message = "bqd,bds->bqs"}> : () -> ()
    %cst_9 = arith.constant dense<0.000000e+00> : vector<8x1x128xf32>
    %13 = tpu.matmul %12, %10, %cst_9 {dimension_numbers = #tpu.dot_dimension_numbers<[2], [1], [1], [2], [0, 0, 0, 1, 1, 2], [0], [0]>} : vector<8x1x32xf32>, vector<8x32x128xf32>, vector<8x1x128xf32> -> vector<8x1x128xf32>
    "tpu.trace_stop"() : () -> ()
    %14 = vector.shape_cast %13 : vector<8x1x128xf32> to vector<8x128xf32>
    %15 = tpu.iota {dimensions = array<i32: 1>} : vector<8x128xi32>
    %c128_i32 = arith.constant 128 : i32
    %16 = arith.muli %arg1, %c128_i32 : i32
    %17 = vector.broadcast %16 : i32 to vector<8x128xi32>
    %18 = arith.addi %15, %17 : vector<8x128xi32>
    %c200_i32 = arith.constant 200 : i32
    %19 = vector.broadcast %c200_i32 : i32 to vector<8x128xi32>
    %20 = arith.cmpi slt, %18, %19 : vector<8x128xi32>
    %cst_10 = arith.constant 0xFF800000 : f32
    %21 = vector.broadcast %cst_10 : f32 to vector<8x128xf32>
    %22 = arith.select %20, %14, %21 : vector<8x128xi1>, vector<8x128xf32>
    %23 = arith.index_cast %arg1 : i32 to index
    %c0_11 = arith.constant 0 : index
    %c0_12 = arith.constant 0 : index
    %24 = vector.load %arg9[%23, %c0_11, %c0_12] : memref<2x8x128xf32, #tpu.memory_space<vmem>>, vector<1x8x128xf32>
    %25 = vector.shape_cast %24 : vector<1x8x128xf32> to vector<8x128xf32>
    %26 = vector.shape_cast %22 : vector<8x128xf32> to vector<1x8x128xf32>
    tpu.vector_store %arg9[%23, %c0_11, %c0_12], %26 {strides = array<i32>} : memref<2x8x128xf32, #tpu.memory_space<vmem>>, vector<1x8x128xf32>,
    %c1_i32 = arith.constant 1 : i32
    %27 = arith.cmpi eq, %arg1, %c1_i32 : i32
    %28 = arith.extui %27 : i1 to i32
    %c0_i32_13 = arith.constant 0 : i32
    %29 = arith.cmpi ne, %28, %c0_i32_13 : i32
    scf.if %29 {
      %c0_14 = arith.constant 0 : index
      %c0_15 = arith.constant 0 : index
      %c0_16 = arith.constant 0 : index
      %30 = vector.load %arg9[%c0_14, %c0_15, %c0_16] : memref<2x8x128xf32, #tpu.memory_space<vmem>>, vector<2x8x128xf32>
      %cst_17 = arith.constant dense<0xFF800000> : vector<8x128xf32>
      %31 = vector.multi_reduction <maximumf>, %30, %cst_17 [0] : vector<2x8x128xf32> to vector<8x128xf32>
      %cst_18 = arith.constant dense<0xFF800000> : vector<8xf32>
      %32 = vector.multi_reduction <maximumf>, %31, %cst_18 [1] : vector<8x128xf32> to vector<8xf32>
      %33 = vector.shape_cast %32 : vector<8xf32> to vector<8x1xf32>
      %34 = vector.shape_cast %33 : vector<8x1xf32> to vector<1x8x1xf32>
      %35 = vector.broadcast %34 : vector<1x8x1xf32> to vector<2x8x128xf32>
      %36 = arith.subf %30, %35 : vector<2x8x128xf32>
      %37 = math.exp %36 : vector<2x8x128xf32>
      %cst_19 = arith.constant dense<0.000000e+00> : vector<8x128xf32>
      %38 = vector.multi_reduction <add>, %37, %cst_19 [0] : vector<2x8x128xf32> to vector<8x128xf32>
      %cst_20 = arith.constant dense<0.000000e+00> : vector<8xf32>
      %39 = vector.multi_reduction <add>, %38, %cst_20 [1] : vector<8x128xf32> to vector<8xf32>
      %40 = vector.shape_cast %39 : vector<8xf32> to vector<8x1xf32>
      %cst_21 = arith.constant 1.000000e+00 : f32
      %41 = vector.broadcast %cst_21 : f32 to vector<8x1xf32>
      %42 = arith.divf %41, %40 : vector<8x1xf32>
      %43 = vector.shape_cast %42 : vector<8x1xf32> to vector<1x8x1xf32>
      %44 = vector.broadcast %43 : vector<1x8x1xf32> to vector<2x8x128xf32>
      %45 = arith.mulf %37, %44 : vector<2x8x128xf32>
      %c0_22 = arith.constant 0 : index
      %c0_23 = arith.constant 0 : index
      %c0_24 = arith.constant 0 : index
      %46 = vector.load %arg9[%c0_22, %c0_23, %c0_24] : memref<2x8x128xf32, #tpu.memory_space<vmem>>, vector<2x8x128xf32>
      tpu.vector_store %arg9[%c0_22, %c0_23, %c0_24], %45 {strides = array<i32>} : memref<2x8x128xf32, #tpu.memory_space<vmem>>, vector<2x8x128xf32>,
    } else {
    }
    return
  }
  func.func @transform_0(%arg0: i32, %arg1: i32) -> (i32, i32) {
    %c0_i32 = arith.constant 0 : i32
    %c0_i32_0 = arith.constant 0 : i32
    return %arg0, %c0_i32 : i32, i32
  }
  func.func @transform_1(%arg0: i32, %arg1: i32) -> (i32, i32, i32) {
    %c0_i32 = arith.constant 0 : i32
    %c0_i32_0 = arith.constant 0 : i32
    return %arg0, %c0_i32, %arg1 : i32, i32, i32
  }
  func.func @transform_2(%arg0: i32, %arg1: i32) -> (i32, i32) {
    %c0_i32 = arith.constant 0 : i32
    %c0_i32_0 = arith.constant 0 : i32
    %c0_i32_1 = arith.constant 0 : i32
    return %c0_i32, %c0_i32_0 : i32, i32
  }
  func.func @transform_3(%arg0: i32, %arg1: i32) -> (i32, i32) {
    %c0_i32 = arith.constant 0 : i32
    %c0_i32_0 = arith.constant 0 : i32
    %c0_i32_1 = arith.constant 0 : i32
    return %c0_i32, %c0_i32_0 : i32, i32
  }
  func.func @transform_4(%arg0: i32, %arg1: i32) -> (i32, i32) {
    %c0_i32 = arith.constant 0 : i32
    %c0_i32_0 = arith.constant 0 : i32
    %c0_i32_1 = arith.constant 0 : i32
    return %c0_i32, %c0_i32_0 : i32, i32
  }
  func.func @transform_5(%arg0: i32, %arg1: i32) -> (i32, i32) {
    %c0_i32 = arith.constant 0 : i32
    %c0_i32_0 = arith.constant 0 : i32
    %c0_i32_1 = arith.constant 0 : i32
    return %c0_i32, %c0_i32_0 : i32, i32
  }
  func.func @transform_6(%arg0: i32, %arg1: i32) -> (i32, i32) {
    %c0_i32 = arith.constant 0 : i32
    %c0_i32_0 = arith.constant 0 : i32
    return %arg0, %c0_i32 : i32, i32
  }
  func.func @transform_7(%arg0: i32, %arg1: i32) -> (i32, i32, i32) {
    %c0_i32 = arith.constant 0 : i32
    %c0_i32_0 = arith.constant 0 : i32
    %c0_i32_1 = arith.constant 0 : i32
    return %c0_i32, %arg0, %c0_i32_0 : i32, i32, i32
  }
}

</mosaic_0001>

<llo_original>
// kernel: attention_step.1
$region0: #{attention_step.1}
  #allocation0 [shape = 'u32[]', space=smem, size = 0x4, offset = 0x4, fixed_abs, tag = 'smem constant byte address 0x4 - core index']
  #allocation1 [shape = 'u32[72,128]{1,0:T(1,128)}', space=vmem, size = 0x9000, scoped, tag = 'internal scratch']
  %s0 = inlined_call_operand.vmem [shape: f32[8,128], index: 0, kind: input, shape index: {}]
  %s1 = inlined_call_operand.hbm [shape: f32[8,32,256], index: 1, kind: input, shape index: {}]
  %s2 = inlined_call_operand.hbm [shape: f32[128,256], index: 2, kind: input, shape index: {}]
  %s3 = inlined_call_operand.vmem [shape: f32[1,128], index: 3, kind: input, shape index: {}]
  %s4 = inlined_call_operand.hbm [shape: f32[128,128], index: 4, kind: input, shape index: {}]
  %s5 = inlined_call_operand.vmem [shape: f32[1,128], index: 5, kind: input, shape index: {}]
  %s6 = inlined_call_operand.vmem [shape: f32[8,128], index: 6, kind: output, shape index: {0}]
  %s7 = inlined_call_operand.vmem [shape: f32[2,8,128], index: 7, kind: output, shape index: {1}]
  %8 = xla_tuple %s6, %s7
  %s9 = sld [smem:[#allocation0]]
  $region85: #{attention_step.1} parent=0
    _
  %s11 = ssub.s32 1, %s9
  %s12 = scalar_select 0, %s11, %s9
  $region1: #{attention_step.1} parent=0
    #allocation2 [shape = 'u8[262144]{0}', space=vmem, size = 0x40000, scoped, tag = 'input window, operand 1']
    #allocation3 [shape = 's32[2]{0}', space=sflag, size = 0x8, scoped, tag = 'scoped memory for attention_step.1']
    #allocation4 [shape = 'u8[131072]{0}', space=vmem, size = 0x20000, scoped, tag = 'input window, operand 2, single buffered']
    #allocation5 [shape = 's32[1]{0}', space=sflag, size = 0x4, scoped, tag = 'scoped memory for attention_step.1']
    #allocation6 [shape = 'u8[65536]{0}', space=vmem, size = 0x10000, scoped, tag = 'input window, operand 4, single buffered']
    %13 = vsyncpa [#allocation3], 0
    %s14 = scalar_lea.sflag [#allocation3], 1
    %15 = vsyncpa %s14, 0
    %16 = vsyncpa [#allocation5], 0
    loop: start=0, step=1, limit=4
    $region2: #{attention_step.1} parent=1 // loop_pre_header
      _
    $region3: #{attention_step.1} parent=1 // loop_header
      %s18 = sphi 0, %s22
      %p19 = scmp.ge.s32.totalorder %s18, 4
      %s25 = sphi 0, %s37
      %s26 = sphi 0, %s33
      %s27 = sphi 0, %s25
      %s28 = sphi 0, %s26
      %s29 = sphi 0, %s27
      %s30 = sphi 0, %s28
      %s40 = sphi 0, %s42
      %s43 = sphi 0, %s40
      %s44 = sphi 0, %s43
      %s60 = sphi 0, %s44
      %s68 = sphi 0, %s70
      %s71 = sphi 0, %s68
      %s72 = sphi 0, %s71
      %s88 = sphi 0, %s72
      %s92 = sphi 0, %s92
      %s94 = sphi 0, %s92
      %s95 = sphi 0, %s94
      %s109 = sphi 0, %s95
      %s113 = sphi 0, %s113
      %s115 = sphi 0, %s113
      %s116 = sphi 0, %s115
      %s130 = sphi 0, %s116
      %s134 = sphi 0, %s134
      %s136 = sphi 0, %s134
      %s137 = sphi 0, %s136
      %s151 = sphi 0, %s137
      %s155 = sphi 0, %s155
      %s157 = sphi 0, %s155
      %s158 = sphi 0, %s157
      %s172 = sphi 0, %s158
      %s178 = sphi 0, %s180
      %s181 = sphi 0, %s178
      %s182 = sphi 0, %s181
      %s198 = sphi 0, %s182
      %s204 = sphi 0, %s206
      %s207 = sphi 0, %s204
      %s208 = sphi 0, %s207
      %s224 = sphi 0, %s208
    $region4: #{attention_step.1} parent=1 // loop_header_branch
      %21 = sbr.rel (%p19) target = $region8
    $region5: #{attention_step.1} parent=1 // loop_body
      %s23 = ssub.s32 %s18, 1
      %s24 = ssub.s32 %s18, 2
      %s31 = sadd.s32 1, %s26
      %p32 = scmp.ge.s32.totalorder %s31, 2
      %s33 = scalar_select %p32, 0, %s31
      %s34 = sadd.s32 1, %s25
      %s35 = scalar_select %p32, %s34, %s25
      %p36 = scmp.ge.s32.totalorder %s35, 1
      %s37 = scalar_select %p36, 0, %s35
      %s38 = ssub.s32 %s25, %s37
      %p39 = scmp.eq.s32.totalorder %s38, 0
      %s41 = sadd.s32 %s40, 1
      %s42 = scalar_select %p39, %s40, %s41
      %p45 = pneg %p39
      %p46 = scmp.eq.s32.totalorder %s18, 1
      %p47 = por %p45, %p46
      %p48 = scmp.ne.s32.totalorder %s40, %s43
      %p49 = scmp.eq.s32.totalorder %s18, 0
      %p50 = por %p48, %p49
      %p51 = scmp.ne.s32.totalorder %s40, %s43
      %p52 = scmp.eq.s32.totalorder %s23, 1
      %p53 = por %p51, %p52
      %p54 = scmp.ne.s32.totalorder %s43, %s44
      %p55 = scmp.eq.s32.totalorder %s23, 0
      %p56 = por %p54, %p55
      %p57 = scmp.ne.s32.totalorder %s43, %s44
      %p58 = scmp.eq.s32.totalorder %s24, 1
      %p59 = por %p57, %p58
      %p61 = scmp.ne.s32.totalorder %s44, %s60
      %p62 = scmp.eq.s32.totalorder %s24, 0
      %p63 = por %p61, %p62
      %s64 = ssub.s32 %s25, %s37
      %s65 = ssub.s32 %s26, %s33
      %s66 = sor.u32 %s64, %s65
      %p67 = scmp.eq.s32.totalorder %s66, 0
      %s69 = sadd.s32 %s68, 1
      %s70 = scalar_select %p67, %s68, %s69
      %p73 = pneg %p67
      %p74 = scmp.eq.s32.totalorder %s18, 1
      %p75 = por %p73, %p74
      %p76 = scmp.ne.s32.totalorder %s68, %s71
      %p77 = scmp.eq.s32.totalorder %s18, 0
      %p78 = por %p76, %p77
      %p79 = scmp.ne.s32.totalorder %s68, %s71
      %p80 = scmp.eq.s32.totalorder %s23, 1
      %p81 = por %p79, %p80
      %p82 = scmp.ne.s32.totalorder %s71, %s72
      %p83 = scmp.eq.s32.totalorder %s23, 0
      %p84 = por %p82, %p83
      %p85 = scmp.ne.s32.totalorder %s71, %s72
      %p86 = scmp.eq.s32.totalorder %s24, 1
      %p87 = por %p85, %p86
      %p89 = scmp.ne.s32.totalorder %s72, %s88
      %p90 = scmp.eq.s32.totalorder %s24, 0
      %p91 = por %p89, %p90
      %s93 = sadd.s32 %s92, 1
      %p96 = scmp.eq.s32.totalorder %s18, 1
      %p97 = scmp.ne.s32.totalorder %s92, %s94
      %p98 = scmp.eq.s32.totalorder %s18, 0
      %p99 = por %p97, %p98
      %p100 = scmp.ne.s32.totalorder %s92, %s94
      %p101 = scmp.eq.s32.totalorder %s23, 1
      %p102 = por %p100, %p101
      %p103 = scmp.ne.s32.totalorder %s94, %s95
      %p104 = scmp.eq.s32.totalorder %s23, 0
      %p105 = por %p103, %p104
      %p106 = scmp.ne.s32.totalorder %s94, %s95
      %p107 = scmp.eq.s32.totalorder %s24, 1
      %p108 = por %p106, %p107
      %p110 = scmp.ne.s32.totalorder %s95, %s109
      %p111 = scmp.eq.s32.totalorder %s24, 0
      %p112 = por %p110, %p111
      %s114 = sadd.s32 %s113, 1
      %p117 = scmp.eq.s32.totalorder %s18, 1
      %p118 = scmp.ne.s32.totalorder %s113, %s115
      %p119 = scmp.eq.s32.totalorder %s18, 0
      %p120 = por %p118, %p119
      %p121 = scmp.ne.s32.totalorder %s113, %s115
      %p122 = scmp.eq.s32.totalorder %s23, 1
      %p123 = por %p121, %p122
      %p124 = scmp.ne.s32.totalorder %s115, %s116
      %p125 = scmp.eq.s32.totalorder %s23, 0
      %p126 = por %p124, %p125
      %p127 = scmp.ne.s32.totalorder %s115, %s116
      %p128 = scmp.eq.s32.totalorder %s24, 1
      %p129 = por %p127, %p128
      %p131 = scmp.ne.s32.totalorder %s116, %s130
      %p132 = scmp.eq.s32.totalorder %s24, 0
      %p133 = por %p131, %p132
      %s135 = sadd.s32 %s134, 1
      %p138 = scmp.eq.s32.totalorder %s18, 1
      %p139 = scmp.ne.s32.totalorder %s134, %s136
      %p140 = scmp.eq.s32.totalorder %s18, 0
      %p141 = por %p139, %p140
      %p142 = scmp.ne.s32.totalorder %s134, %s136
      %p143 = scmp.eq.s32.totalorder %s23, 1
      %p144 = por %p142, %p143
      %p145 = scmp.ne.s32.totalorder %s136, %s137
      %p146 = scmp.eq.s32.totalorder %s23, 0
      %p147 = por %p145, %p146
      %p148 = scmp.ne.s32.totalorder %s136, %s137
      %p149 = scmp.eq.s32.totalorder %s24, 1
      %p150 = por %p148, %p149
      %p152 = scmp.ne.s32.totalorder %s137, %s151
      %p153 = scmp.eq.s32.totalorder %s24, 0
      %p154 = por %p152, %p153
      %s156 = sadd.s32 %s155, 1
      %p159 = scmp.eq.s32.totalorder %s18, 1
      %p160 = scmp.ne.s32.totalorder %s155, %s157
      %p161 = scmp.eq.s32.totalorder %s18, 0
      %p162 = por %p160, %p161
      %p163 = scmp.ne.s32.totalorder %s155, %s157
      %p164 = scmp.eq.s32.totalorder %s23, 1
      %p165 = por %p163, %p164
      %p166 = scmp.ne.s32.totalorder %s157, %s158
      %p167 = scmp.eq.s32.totalorder %s23, 0
      %p168 = por %p166, %p167
      %p169 = scmp.ne.s32.totalorder %s157, %s158
      %p170 = scmp.eq.s32.totalorder %s24, 1
      %p171 = por %p169, %p170
      %p173 = scmp.ne.s32.totalorder %s158, %s172
      %p174 = scmp.eq.s32.totalorder %s24, 0
      %p175 = por %p173, %p174
      %s176 = ssub.s32 %s25, %s37
      %p177 = scmp.eq.s32.totalorder %s176, 0
      %s179 = sadd.s32 %s178, 1
      %s180 = scalar_select %p177, %s178, %s179
      %p183 = pneg %p177
      %p184 = scmp.eq.s32.totalorder %s18, 1
      %p185 = por %p183, %p184
      %p186 = scmp.ne.s32.totalorder %s178, %s181
      %p187 = scmp.eq.s32.totalorder %s18, 0
      %p188 = por %p186, %p187
      %p189 = scmp.ne.s32.totalorder %s178, %s181
      %p190 = scmp.eq.s32.totalorder %s23, 1
      %p191 = por %p189, %p190
      %p192 = scmp.ne.s32.totalorder %s181, %s182
      %p193 = scmp.eq.s32.totalorder %s23, 0
      %p194 = por %p192, %p193
      %p195 = scmp.ne.s32.totalorder %s181, %s182
      %p196 = scmp.eq.s32.totalorder %s24, 1
      %p197 = por %p195, %p196
      %p199 = scmp.ne.s32.totalorder %s182, %s198
      %p200 = scmp.eq.s32.totalorder %s24, 0
      %p201 = por %p199, %p200
      %s202 = ssub.s32 %s25, %s37
      %p203 = scmp.eq.s32.totalorder %s202, 0
      %s205 = sadd.s32 %s204, 1
      %s206 = scalar_select %p203, %s204, %s205
      %p209 = pneg %p203
      %p210 = scmp.eq.s32.totalorder %s18, 1
      %p211 = por %p209, %p210
      %p212 = scmp.ne.s32.totalorder %s204, %s207
      %p213 = scmp.eq.s32.totalorder %s18, 0
      %p214 = por %p212, %p213
      %p215 = scmp.ne.s32.totalorder %s204, %s207
      %p216 = scmp.eq.s32.totalorder %s23, 1
      %p217 = por %p215, %p216
      %p218 = scmp.ne.s32.totalorder %s207, %s208
      %p219 = scmp.eq.s32.totalorder %s23, 0
      %p220 = por %p218, %p219
      %p221 = scmp.ne.s32.totalorder %s207, %s208
      %p222 = scmp.eq.s32.totalorder %s24, 1
      %p223 = por %p221, %p222
      %p225 = scmp.ne.s32.totalorder %s208, %s224
      %p226 = scmp.eq.s32.totalorder %s24, 0
      %p227 = por %p225, %p226
      %p228 = scmp.le.s32.totalorder 1, %s18
      %p229 = scmp.lt.s32.totalorder %s18, 3
      %p230 = pnand %p228, %p229
      %p231 = pneg %p230
      // Predicated region
      $region9: #{attention_step.1} parent=5 // pred_check
        _
      $region10: #{attention_step.1} parent=5 // pred_check_branch
        %233 = sbr.rel (%p230) target = $region12
      $region11: #{attention_step.1} parent=5 // pred_region
        %s234 = ssub.s32 %s18, 1
        // Predicated region
        $region13: #{attention_step.1} parent=11 // pred_check
          %p235 = pneg %p56
        $region14: #{attention_step.1} parent=11 // pred_check_branch
          %237 = sbr.rel (%p235) target = $region16
        $region15: #{attention_step.1} parent=11 // pred_region
          %p238 = scmp.lt.s32.totalorder %s27, 0
          %s239 = scalar_select %p238, %s27, 0
          %s240 = smul.addr %s239, 8
          %s241 = scalar_lea.vmem %s0, %s240
        $region16: #{attention_step.1} parent=11 // pred_fallthru
          _
        // Predicated region
        $region17: #{attention_step.1} parent=11 // pred_check
          %p242 = pneg %p105
        $region18: #{attention_step.1} parent=11 // pred_check_branch
          %244 = sbr.rel (%p242) target = $region20
        $region19: #{attention_step.1} parent=11 // pred_region
          %246 = vsyncadd [#allocation5], 0
          %s247 = sshll.u32 %s2, 4
          %s248 = int_to_ptr.hbm [resolvable:$true] %s247
          %s249 = sshll.u32 [#allocation4], 4
          %s250 = int_to_ptr.vmem [resolvable:$true] %s249
          %255 = dma.hbm_to_vmem [thread:$0]  %s248, 4096, %s250, [#allocation5], 256, 256, 16
        $region20: #{attention_step.1} parent=11 // pred_fallthru
          _
        // Predicated region
        $region21: #{attention_step.1} parent=11 // pred_check
          %p256 = pneg %p126
        $region22: #{attention_step.1} parent=11 // pred_check_branch
          %258 = sbr.rel (%p256) target = $region24
        $region23: #{attention_step.1} parent=11 // pred_region
          _
        $region24: #{attention_step.1} parent=11 // pred_fallthru
          _
        // Predicated region
        $region25: #{attention_step.1} parent=11 // pred_check
          %p259 = pneg %p147
        $region26: #{attention_step.1} parent=11 // pred_check_branch
          %261 = sbr.rel (%p259) target = $region28
        $region27: #{attention_step.1} parent=11 // pred_region
          %263 = vsyncadd [#allocation5], 0
          %s264 = sshll.u32 %s4, 4
          %s265 = int_to_ptr.hbm [resolvable:$true] %s264
          %s266 = sshll.u32 [#allocation6], 4
          %s267 = int_to_ptr.vmem [resolvable:$true] %s266
          %272 = dma.hbm_to_vmem [thread:$0]  %s265, 2048, %s267, [#allocation5], 128, 128, 8
        $region28: #{attention_step.1} parent=11 // pred_fallthru
          _
        // Predicated region
        $region29: #{attention_step.1} parent=11 // pred_check
          %p273 = pneg %p168
        $region30: #{attention_step.1} parent=11 // pred_check_branch
          %275 = sbr.rel (%p273) target = $region32
        $region31: #{attention_step.1} parent=11 // pred_region
          _
        $region32: #{attention_step.1} parent=11 // pred_fallthru
          _
      $region12: #{attention_step.1} parent=5 // pred_fallthru
        _
      %p276 = scmp.lt.s32.totalorder %s18, 2
      // Predicated region
      $region33: #{attention_step.1} parent=5 // pred_check
        %p277 = pneg %p276
      $region34: #{attention_step.1} parent=5 // pred_check_branch
        %279 = sbr.rel (%p277) target = $region36
      $region35: #{attention_step.1} parent=5 // pred_region
        // Predicated region
        $region37: #{attention_step.1} parent=35 // pred_check
          %p280 = pneg %p78
        $region38: #{attention_step.1} parent=35 // pred_check_branch
          %282 = sbr.rel (%p280) target = $region40
        $region39: #{attention_step.1} parent=35 // pred_region
          %s283 = sand.u32 %s68, 1
          %s284 = scalar_lea.sflag [#allocation3], %s283
          %s285 = sand.u32 %s68, 1
          %s286 = smul.addr %s285, 256
          %s287 = scalar_lea.vmem [#allocation2], %s286
          %s288 = smul.u32 8, %s25
          %290 = vsyncadd %s284, 0
          %s291 = smul.addr %s288, 8
          %s292 = sadd.s32 %s26, %s291
          %s293 = smul.addr %s292, 8
          %s294 = scalar_lea.hbm %s1, %s293
          %s295 = sshll.u32 %s294, 4
          %s296 = int_to_ptr.hbm [resolvable:$true] %s295
          %s297 = sshll.u32 %s287, 4
          %s298 = int_to_ptr.vmem [resolvable:$true] %s297
          %303 = dma.hbm_to_vmem [thread:$0]  %s296, 4096, %s298, %s284, 256, 128, 8
        $region40: #{attention_step.1} parent=35 // pred_fallthru
          _
      $region36: #{attention_step.1} parent=5 // pred_fallthru
        _
      %p304 = scmp.le.s32.totalorder 1, %s18
      %p305 = scmp.lt.s32.totalorder %s18, 3
      %p306 = pnand %p304, %p305
      %p307 = pneg %p306
      // Predicated region
      $region41: #{attention_step.1} parent=5 // pred_check
        _
      $region42: #{attention_step.1} parent=5 // pred_check_branch
        %309 = sbr.rel (%p306) target = $region44
      $region43: #{attention_step.1} parent=5 // pred_region
        %s310 = ssub.s32 %s18, 1
        %s311 = sand.u32 %s71, 1
        %s312 = scalar_lea.sflag [#allocation3], %s311
        %s313 = sand.u32 %s71, 1
        %s314 = smul.addr %s313, 256
        %s315 = scalar_lea.vmem [#allocation2], %s314
        // Predicated region
        $region45: #{attention_step.1} parent=43 // pred_check
          %p316 = pneg %p84
        $region46: #{attention_step.1} parent=43 // pred_check_branch
          %318 = sbr.rel (%p316) target = $region48
        $region47: #{attention_step.1} parent=43 // pred_region
          %320 = dma.done %s312, 4096
        $region48: #{attention_step.1} parent=43 // pred_fallthru
          _
        // Predicated region
        $region49: #{attention_step.1} parent=43 // pred_check
          %p321 = pneg %p105
        $region50: #{attention_step.1} parent=43 // pred_check_branch
          %323 = sbr.rel (%p321) target = $region52
        $region51: #{attention_step.1} parent=43 // pred_region
          %325 = dma.done [#allocation5], 4096
        $region52: #{attention_step.1} parent=43 // pred_fallthru
          _
        // Predicated region
        $region53: #{attention_step.1} parent=43 // pred_check
          %p326 = pneg %p147
        $region54: #{attention_step.1} parent=43 // pred_check_branch
          %328 = sbr.rel (%p326) target = $region56
        $region55: #{attention_step.1} parent=43 // pred_region
          %330 = dma.done [#allocation5], 2048
        $region56: #{attention_step.1} parent=43 // pred_fallthru
          _
        %p331 = scmp.lt.s32.totalorder %s27, 0
        %s332 = scalar_select %p331, %s27, 0
        %s333 = smul.addr %s332, 8
        %s334 = scalar_lea.vmem %s0, %s333
        %p335 = pneg %p56
        %p336 = pneg %p53
        %s337 = sand.u32 %s71, 1
        %s338 = scalar_lea.sflag [#allocation3], %s337
        %s339 = sand.u32 %s71, 1
        %s340 = smul.addr %s339, 256
        %s341 = scalar_lea.vmem [#allocation2], %s340
        %p342 = pneg %p84
        %p343 = pneg %p81
        %p344 = pneg %p105
        %p345 = pneg %p102
        %p346 = pneg %p126
        %p347 = pneg %p123
        %p348 = pneg %p147
        %p349 = pneg %p144
        %p350 = pneg %p168
        %p351 = pneg %p165
        %p352 = pneg %p194
        %p353 = pneg %p191
        %p354 = scmp.lt.s32.totalorder %s27, 0
        %s355 = scalar_select %p354, %s27, 0
        %s356 = smul.addr %s355, 8
        %s357 = scalar_lea.vmem %s6, %s356
        %p358 = pneg %p220
        %p359 = pneg %p217
        %p360 = scmp.lt.s32.totalorder %s27, 0
        %s361 = scalar_select %p360, %s27, 0
        %s362 = smul.addr %s361, 8
        %s363 = scalar_lea.vmem %s7, %s362
        %p364 = scmp.lt.s32.totalorder %s27, 0
        %s365 = scalar_select %p364, %s27, 0
        %s366 = smul.addr %s365, 8
        %s367 = scalar_lea.vmem %s0, %s366
        %s368 = smul.u32 8, %s27
        %p369 = scmp.lt.s32.totalorder %s27, 0
        %s370 = scalar_select %p369, %s27, 0
        %s371 = smul.addr %s370, 8
        %s372 = scalar_lea.vmem %s6, %s371
        %p373 = scmp.lt.s32.totalorder %s27, 0
        %s374 = scalar_select %p373, %s27, 0
        %s375 = smul.addr %s374, 8
        %s376 = scalar_lea.vmem %s7, %s375
        %v377 = vld [vmem:[%s367] sm:$0xff]
        %v378 = vld [vmem:[#allocation4] sm:$0xff]
        %v379 = vld [vmem:[#allocation4 + $0x8] sm:$0xff]
        %v380 = vld [vmem:[#allocation4 + $0x10] sm:$0xff]
        %v381 = vld [vmem:[#allocation4 + $0x18] sm:$0xff]
        %v382 = vld [vmem:[#allocation4 + $0x20] sm:$0xff]
        %v383 = vld [vmem:[#allocation4 + $0x28] sm:$0xff]
        %v384 = vld [vmem:[#allocation4 + $0x30] sm:$0xff]
        %v385 = vld [vmem:[#allocation4 + $0x38] sm:$0xff]
        %v386 = vld [vmem:[#allocation4 + $0x40] sm:$0xff]
        %v387 = vld [vmem:[#allocation4 + $0x48] sm:$0xff]
        %v388 = vld [vmem:[#allocation4 + $0x50] sm:$0xff]
        %v389 = vld [vmem:[#allocation4 + $0x58] sm:$0xff]
        %v390 = vld [vmem:[#allocation4 + $0x60] sm:$0xff]
        %v391 = vld [vmem:[#allocation4 + $0x68] sm:$0xff]
        %v392 = vld [vmem:[#allocation4 + $0x70] sm:$0xff]
        %v393 = vld [vmem:[#allocation4 + $0x78] sm:$0xff]
        %v394 = vld [vmem:[#allocation4 + $0x80] sm:$0xff]
        %v395 = vld [vmem:[#allocation4 + $0x88] sm:$0xff]
        %v396 = vld [vmem:[#allocation4 + $0x90] sm:$0xff]
        %v397 = vld [vmem:[#allocation4 + $0x98] sm:$0xff]
        %v398 = vld [vmem:[#allocation4 + $0xa0] sm:$0xff]
        %v399 = vld [vmem:[#allocation4 + $0xa8] sm:$0xff]
        %v400 = vld [vmem:[#allocation4 + $0xb0] sm:$0xff]
        %v401 = vld [vmem:[#allocation4 + $0xb8] sm:$0xff]
        %v402 = vld [vmem:[#allocation4 + $0xc0] sm:$0xff]
        %v403 = vld [vmem:[#allocation4 + $0xc8] sm:$0xff]
        %v404 = vld [vmem:[#allocation4 + $0xd0] sm:$0xff]
        %v405 = vld [vmem:[#allocation4 + $0xd8] sm:$0xff]
        %v406 = vld [vmem:[#allocation4 + $0xe0] sm:$0xff]
        %v407 = vld [vmem:[#allocation4 + $0xe8] sm:$0xff]
        %v408 = vld [vmem:[#allocation4 + $0xf0] sm:$0xff]
        %v409 = vld [vmem:[#allocation4 + $0xf8] sm:$0xff]
        %410 = vmatpush.msra.mxu0 %v408
        %411 = vmatpush.msra.mxu0 %v406
        %412 = vmatpush.msra.mxu0 %v404
        %413 = vmatpush.msra.mxu0 %v402
        %414 = vmatpush.msra.mxu0 %v400
        %415 = vmatpush.msra.mxu0 %v398
        %416 = vmatpush.msra.mxu0 %v396
        %417 = vmatpush.msra.mxu0 %v394
        %418 = vmatpush.msra.mxu0 %v392
        %419 = vmatpush.msra.mxu0 %v390
        %420 = vmatpush.msra.mxu0 %v388
        %421 = vmatpush.msra.mxu0 %v386
        %422 = vmatpush.msra.mxu0 %v384
        %423 = vmatpush.msra.mxu0 %v382
        %424 = vmatpush.msra.mxu0 %v380
        %425 = vmatpush.msra.mxu0 %v378
        %426 = vmatmul.f32.gmra.mxu0 %v377
        %v427 = vpop.f32.mrf.mxu0
        %v428 = vadd.f32 0.0, %v427
        %429 = vdwg.mxu0
        %430 = vmatpush.msra.mxu0 %v409
        %431 = vmatpush.msra.mxu0 %v407
        %432 = vmatpush.msra.mxu0 %v405
        %433 = vmatpush.msra.mxu0 %v403
        %434 = vmatpush.msra.mxu0 %v401
        %435 = vmatpush.msra.mxu0 %v399
        %436 = vmatpush.msra.mxu0 %v397
        %437 = vmatpush.msra.mxu0 %v395
        %438 = vmatpush.msra.mxu0 %v393
        %439 = vmatpush.msra.mxu0 %v391
        %440 = vmatpush.msra.mxu0 %v389
        %441 = vmatpush.msra.mxu0 %v387
        %442 = vmatpush.msra.mxu0 %v385
        %443 = vmatpush.msra.mxu0 %v383
        %444 = vmatpush.msra.mxu0 %v381
        %445 = vmatpush.msra.mxu0 %v379
        %446 = vmatmul.f32.gmra.mxu0 %v377
        %v447 = vpop.f32.mrf.mxu0
        %v448 = vadd.f32 0.0, %v447
        %449 = vdwg.mxu0
        %v450 = vld [vmem:[%s3] sm:$0x1]
        %v452 = vperm.slane %v450, 0
        %v454 = vadd.f32 %v428, %v452
        %p455 = scmp.eq.s32.totalorder %s28, 0
        // Predicated region
        $region57: #{attention_step.1} parent=43 // pred_check
          %p456 = pneg %p455
        $region58: #{attention_step.1} parent=43 // pred_check_branch
          %458 = sbr.rel (%p456) target = $region60
        $region59: #{attention_step.1} parent=43 // pred_region
          %v459 = vld [vmem:[#allocation6] sm:$0xff]
          %v460 = vld [vmem:[#allocation6 + $0x8] sm:$0xff]
          %v461 = vld [vmem:[#allocation6 + $0x10] sm:$0xff]
          %v462 = vld [vmem:[#allocation6 + $0x18] sm:$0xff]
          %v463 = vld [vmem:[#allocation6 + $0x20] sm:$0xff]
          %v464 = vld [vmem:[#allocation6 + $0x28] sm:$0xff]
          %v465 = vld [vmem:[#allocation6 + $0x30] sm:$0xff]
          %v466 = vld [vmem:[#allocation6 + $0x38] sm:$0xff]
          %v467 = vld [vmem:[#allocation6 + $0x40] sm:$0xff]
          %v468 = vld [vmem:[#allocation6 + $0x48] sm:$0xff]
          %v469 = vld [vmem:[#allocation6 + $0x50] sm:$0xff]
          %v470 = vld [vmem:[#allocation6 + $0x58] sm:$0xff]
          %v471 = vld [vmem:[#allocation6 + $0x60] sm:$0xff]
          %v472 = vld [vmem:[#allocation6 + $0x68] sm:$0xff]
          %v473 = vld [vmem:[#allocation6 + $0x70] sm:$0xff]
          %v474 = vld [vmem:[#allocation6 + $0x78] sm:$0xff]
          %475 = vmatpush.msra.mxu0 %v474
          %476 = vmatpush.msra.mxu0 %v473
          %477 = vmatpush.msra.mxu0 %v472
          %478 = vmatpush.msra.mxu0 %v471
          %479 = vmatpush.msra.mxu0 %v470
          %480 = vmatpush.msra.mxu0 %v469
          %481 = vmatpush.msra.mxu0 %v468
          %482 = vmatpush.msra.mxu0 %v467
          %483 = vmatpush.msra.mxu0 %v466
          %484 = vmatpush.msra.mxu0 %v465
          %485 = vmatpush.msra.mxu0 %v464
          %486 = vmatpush.msra.mxu0 %v463
          %487 = vmatpush.msra.mxu0 %v462
          %488 = vmatpush.msra.mxu0 %v461
          %489 = vmatpush.msra.mxu0 %v460
          %490 = vmatpush.msra.mxu0 %v459
          %491 = vmatmul.f32.gmra.mxu0 %v454
          %v492 = vpop.f32.mrf.mxu0
          %v493 = vadd.f32 %v448, %v492
          %494 = vdwg.mxu0
          %v495 = vld [vmem:[%s5] sm:$0x1]
          %v497 = vperm.slane %v495, 0
          %v499 = vadd.f32 %v493, %v497
          %v500 = vtanh.pop %v499
          %501 = vst [vmem:[%s372] sm:$0xff] %v500
        $region60: #{attention_step.1} parent=43 // pred_fallthru
          _
        %v502 = vld [vmem:[%s315] sm:$0xff]
        %v503 = vld [vmem:[%s315 + $0x8] sm:$0xff]
        %v504 = vld [vmem:[%s315 + $0x10] sm:$0xff]
        %v505 = vld [vmem:[%s315 + $0x18] sm:$0xff]
        %v506 = vld [vmem:[%s315 + $0x20] sm:$0xff]
        %v507 = vld [vmem:[%s315 + $0x28] sm:$0xff]
        %v508 = vld [vmem:[%s315 + $0x30] sm:$0xff]
        %v509 = vld [vmem:[%s315 + $0x38] sm:$0xff]
        %v510 = vld [vmem:[%s315 + $0x40] sm:$0xff]
        %v511 = vld [vmem:[%s315 + $0x48] sm:$0xff]
        %v512 = vld [vmem:[%s315 + $0x50] sm:$0xff]
        %v513 = vld [vmem:[%s315 + $0x58] sm:$0xff]
        %v514 = vld [vmem:[%s315 + $0x60] sm:$0xff]
        %v515 = vld [vmem:[%s315 + $0x68] sm:$0xff]
        %v516 = vld [vmem:[%s315 + $0x70] sm:$0xff]
        %v517 = vld [vmem:[%s315 + $0x78] sm:$0xff]
        %v518 = vld [vmem:[%s315 + $0x80] sm:$0xff]
        %v519 = vld [vmem:[%s315 + $0x88] sm:$0xff]
        %v520 = vld [vmem:[%s315 + $0x90] sm:$0xff]
        %v521 = vld [vmem:[%s315 + $0x98] sm:$0xff]
        %v522 = vld [vmem:[%s315 + $0xa0] sm:$0xff]
        %v523 = vld [vmem:[%s315 + $0xa8] sm:$0xff]
        %v524 = vld [vmem:[%s315 + $0xb0] sm:$0xff]
        %v525 = vld [vmem:[%s315 + $0xb8] sm:$0xff]
        %v526 = vld [vmem:[%s315 + $0xc0] sm:$0xff]
        %v527 = vld [vmem:[%s315 + $0xc8] sm:$0xff]
        %v528 = vld [vmem:[%s315 + $0xd0] sm:$0xff]
        %v529 = vld [vmem:[%s315 + $0xd8] sm:$0xff]
        %v530 = vld [vmem:[%s315 + $0xe0] sm:$0xff]
        %v531 = vld [vmem:[%s315 + $0xe8] sm:$0xff]
        %v532 = vld [vmem:[%s315 + $0xf0] sm:$0xff]
        %v533 = vld [vmem:[%s315 + $0xf8] sm:$0xff]
        %v535 = vrot.slane %v454, 1
        %v536 = vrot.slane %v454, 2
        %v537 = vrot.slane %v454, 3
        %v538 = vrot.slane %v454, 4
        %v539 = vrot.slane %v454, 5
        %v540 = vrot.slane %v454, 6
        %v541 = vrot.slane %v454, 7
        %vm542 = vcmask 261120
        %v543 = vsel %vm542, %v454, 0
        %545 = vmatpush.msra.mxu0 0.0
        %546 = vmatpush.msra.mxu0 0.0
        %547 = vmatpush.msra.mxu0 0.0
        %548 = vmatpush.msra.mxu0 0.0
        %549 = vmatpush.msra.mxu0 0.0
        %550 = vmatpush.msra.mxu0 0.0
        %551 = vmatpush.msra.mxu0 0.0
        %552 = vmatpush.msra.mxu0 0.0
        %553 = vmatpush.msra.mxu0 0.0
        %554 = vmatpush.msra.mxu0 0.0
        %555 = vmatpush.msra.mxu0 0.0
        %556 = vmatpush.msra.mxu0 0.0
        %557 = vmatpush.msra.mxu0 %v505
        %558 = vmatpush.msra.mxu0 %v504
        %559 = vmatpush.msra.mxu0 %v503
        %560 = vmatpush.msra.mxu0 %v502
        %561 = vmatmul.f32.gmra.mxu0 %v543
        %v562 = vpop.f32.mrf.mxu0
        %v563 = vadd.f32 0.0, %v562
        %564 = vdwg.mxu0
        %v565 = vsel %vm542, %v535, 0
        %567 = vmatpush.msra.mxu0 0.0
        %568 = vmatpush.msra.mxu0 0.0
        %569 = vmatpush.msra.mxu0 0.0
        %570 = vmatpush.msra.mxu0 0.0
        %571 = vmatpush.msra.mxu0 0.0
        %572 = vmatpush.msra.mxu0 0.0
        %573 = vmatpush.msra.mxu0 0.0
        %574 = vmatpush.msra.mxu0 0.0
        %575 = vmatpush.msra.mxu0 0.0
        %576 = vmatpush.msra.mxu0 0.0
        %577 = vmatpush.msra.mxu0 0.0
        %578 = vmatpush.msra.mxu0 0.0
        %579 = vmatpush.msra.mxu0 %v509
        %580 = vmatpush.msra.mxu0 %v508
        %581 = vmatpush.msra.mxu0 %v507
        %582 = vmatpush.msra.mxu0 %v506
        %583 = vmatmul.f32.gmra.mxu0 %v565
        %v584 = vpop.f32.mrf.mxu0
        %v585 = vadd.f32 0.0, %v584
        %586 = vdwg.mxu0
        %v587 = vsel %vm542, %v536, 0
        %589 = vmatpush.msra.mxu0 0.0
        %590 = vmatpush.msra.mxu0 0.0
        %591 = vmatpush.msra.mxu0 0.0
        %592 = vmatpush.msra.mxu0 0.0
        %593 = vmatpush.msra.mxu0 0.0
        %594 = vmatpush.msra.mxu0 0.0
        %595 = vmatpush.msra.mxu0 0.0
        %596 = vmatpush.msra.mxu0 0.0
        %597 = vmatpush.msra.mxu0 0.0
        %598 = vmatpush.msra.mxu0 0.0
        %599 = vmatpush.msra.mxu0 0.0
        %600 = vmatpush.msra.mxu0 0.0
        %601 = vmatpush.msra.mxu0 %v513
        %602 = vmatpush.msra.mxu0 %v512
        %603 = vmatpush.msra.mxu0 %v511
        %604 = vmatpush.msra.mxu0 %v510
        %605 = vmatmul.f32.gmra.mxu0 %v587
        %v606 = vpop.f32.mrf.mxu0
        %v607 = vadd.f32 0.0, %v606
        %608 = vdwg.mxu0
        %v609 = vsel %vm542, %v537, 0
        %611 = vmatpush.msra.mxu0 0.0
        %612 = vmatpush.msra.mxu0 0.0
        %613 = vmatpush.msra.mxu0 0.0
        %614 = vmatpush.msra.mxu0 0.0
        %615 = vmatpush.msra.mxu0 0.0
        %616 = vmatpush.msra.mxu0 0.0
        %617 = vmatpush.msra.mxu0 0.0
        %618 = vmatpush.msra.mxu0 0.0
        %619 = vmatpush.msra.mxu0 0.0
        %620 = vmatpush.msra.mxu0 0.0
        %621 = vmatpush.msra.mxu0 0.0
        %622 = vmatpush.msra.mxu0 0.0
        %623 = vmatpush.msra.mxu0 %v517
        %624 = vmatpush.msra.mxu0 %v516
        %625 = vmatpush.msra.mxu0 %v515
        %626 = vmatpush.msra.mxu0 %v514
        %627 = vmatmul.f32.gmra.mxu0 %v609
        %v628 = vpop.f32.mrf.mxu0
        %v629 = vadd.f32 0.0, %v628
        %630 = vdwg.mxu0
        %v631 = vsel %vm542, %v538, 0
        %633 = vmatpush.msra.mxu0 0.0
        %634 = vmatpush.msra.mxu0 0.0
        %635 = vmatpush.msra.mxu0 0.0
        %636 = vmatpush.msra.mxu0 0.0
        %637 = vmatpush.msra.mxu0 0.0
        %638 = vmatpush.msra.mxu0 0.0
        %639 = vmatpush.msra.mxu0 0.0
        %640 = vmatpush.msra.mxu0 0.0
        %641 = vmatpush.msra.mxu0 0.0
        %642 = vmatpush.msra.mxu0 0.0
        %643 = vmatpush.msra.mxu0 0.0
        %644 = vmatpush.msra.mxu0 0.0
        %645 = vmatpush.msra.mxu0 %v521
        %646 = vmatpush.msra.mxu0 %v520
        %647 = vmatpush.msra.mxu0 %v519
        %648 = vmatpush.msra.mxu0 %v518
        %649 = vmatmul.f32.gmra.mxu0 %v631
        %v650 = vpop.f32.mrf.mxu0
        %v651 = vadd.f32 0.0, %v650
        %652 = vdwg.mxu0
        %v653 = vsel %vm542, %v539, 0
        %655 = vmatpush.msra.mxu0 0.0
        %656 = vmatpush.msra.mxu0 0.0
        %657 = vmatpush.msra.mxu0 0.0
        %658 = vmatpush.msra.mxu0 0.0
        %659 = vmatpush.msra.mxu0 0.0
        %660 = vmatpush.msra.mxu0 0.0
        %661 = vmatpush.msra.mxu0 0.0
        %662 = vmatpush.msra.mxu0 0.0
        %663 = vmatpush.msra.mxu0 0.0
        %664 = vmatpush.msra.mxu0 0.0
        %665 = vmatpush.msra.mxu0 0.0
        %666 = vmatpush.msra.mxu0 0.0
        %667 = vmatpush.msra.mxu0 %v525
        %668 = vmatpush.msra.mxu0 %v524
        %669 = vmatpush.msra.mxu0 %v523
        %670 = vmatpush.msra.mxu0 %v522
        %671 = vmatmul.f32.gmra.mxu0 %v653
        %v672 = vpop.f32.mrf.mxu0
        %v673 = vadd.f32 0.0, %v672
        %674 = vdwg.mxu0
        %v675 = vsel %vm542, %v540, 0
        %677 = vmatpush.msra.mxu0 0.0
        %678 = vmatpush.msra.mxu0 0.0
        %679 = vmatpush.msra.mxu0 0.0
        %680 = vmatpush.msra.mxu0 0.0
        %681 = vmatpush.msra.mxu0 0.0
        %682 = vmatpush.msra.mxu0 0.0
        %683 = vmatpush.msra.mxu0 0.0
        %684 = vmatpush.msra.mxu0 0.0
        %685 = vmatpush.msra.mxu0 0.0
        %686 = vmatpush.msra.mxu0 0.0
        %687 = vmatpush.msra.mxu0 0.0
        %688 = vmatpush.msra.mxu0 0.0
        %689 = vmatpush.msra.mxu0 %v529
        %690 = vmatpush.msra.mxu0 %v528
        %691 = vmatpush.msra.mxu0 %v527
        %692 = vmatpush.msra.mxu0 %v526
        %693 = vmatmul.f32.gmra.mxu0 %v675
        %v694 = vpop.f32.mrf.mxu0
        %v695 = vadd.f32 0.0, %v694
        %696 = vdwg.mxu0
        %v697 = vsel %vm542, %v541, 0
        %699 = vmatpush.msra.mxu0 0.0
        %700 = vmatpush.msra.mxu0 0.0
        %701 = vmatpush.msra.mxu0 0.0
        %702 = vmatpush.msra.mxu0 0.0
        %703 = vmatpush.msra.mxu0 0.0
        %704 = vmatpush.msra.mxu0 0.0
        %705 = vmatpush.msra.mxu0 0.0
        %706 = vmatpush.msra.mxu0 0.0
        %707 = vmatpush.msra.mxu0 0.0
        %708 = vmatpush.msra.mxu0 0.0
        %709 = vmatpush.msra.mxu0 0.0
        %710 = vmatpush.msra.mxu0 0.0
        %711 = vmatpush.msra.mxu0 %v533
        %712 = vmatpush.msra.mxu0 %v532
        %713 = vmatpush.msra.mxu0 %v531
        %714 = vmatpush.msra.mxu0 %v530
        %715 = vmatmul.f32.gmra.mxu0 %v697
        %v716 = vpop.f32.mrf.mxu0
        %v717 = vadd.f32 0.0, %v716
        %718 = vdwg.mxu0
        %v719 = vlaneseq
        %v720 = vand.u32 %v719, 127
        %s721 = smul.u32 %s28, 128
        %v722 = vstv %s721
        %v723 = vadd.s32 %v720, %v722
        %vm724 = vcmp.lt.s32.totalorder %v723, 200
        %v733 = vrot.slane %v585, 7
        %vm734 = vcmask 1041409
        %v735 = vsel %vm734, %v733, %v563
        %v736 = vrot.slane %v607, 6
        %vm737 = vcmask 1042434
        %v738 = vsel %vm737, %v736, %v735
        %v739 = vrot.slane %v629, 5
        %vm740 = vcmask 1043459
        %v741 = vsel %vm740, %v739, %v738
        %v742 = vrot.slane %v651, 4
        %vm743 = vcmask 1044484
        %v744 = vsel %vm743, %v742, %v741
        %v745 = vrot.slane %v673, 3
        %vm746 = vcmask 1045509
        %v747 = vsel %vm746, %v745, %v744
        %v748 = vrot.slane %v695, 2
        %vm749 = vcmask 1046534
        %v750 = vsel %vm749, %v748, %v747
        %v751 = vrot.slane %v717, 1
        %vm752 = vcmask 1047559
        %v753 = vsel %vm752, %v751, %v750
        %v755 = vsel %vm724, %v753, -inf
        %s756 = smul.u32 %s28, 8
        %s757 = scalar_lea.vmem %s376, %s756
        %758 = vst [vmem:[%s757] sm:$0xff] %v755
        %p759 = scmp.eq.s32.totalorder %s28, 1
        // Predicated region
        $region61: #{attention_step.1} parent=43 // pred_check
          %p760 = pneg %p759
        $region62: #{attention_step.1} parent=43 // pred_check_branch
          %762 = sbr.rel (%p760) target = $region64
        $region63: #{attention_step.1} parent=43 // pred_region
          %v763 = vld [vmem:[%s376] sm:$0xff]
          %v764 = vld [vmem:[%s376 + $0x8] sm:$0xff]
          %v765 = vmax.f32 %v763, %v764
          %766 = vmax.xlane.f32.xlu0 %v765
          %v767 = vpop.xlane.xlu0 %766
          %v768 = vsub.f32 %v763, %v767
          %v769 = vsub.f32 %v764, %v767
          %v770 = vmul.f32 %v768, 1.442695
          %v771 = vpow.pop %v770
          %v772 = vmul.f32 %v769, 1.442695
          %v773 = vpow.pop %v772
          %v774 = vadd.f32 %v771, %v773
          %775 = vadd.xlane.f32.xlu0 %v774
          %v776 = vpop.xlane.xlu0 %775
          %v777 = vrcp.pop %v776
          %v778 = vmul.f32 %v776, %v777
          %v779 = vsub.f32 1.0, %v778
          %v780 = vmul.f32 %v777, %v779
          %v781 = vadd.f32 %v777, %v780
          %vm782 = vweird.f32 %v776
          %vm783 = vweird.f32 %v777
          %vm784 = vmor %vm782, %vm783
          %v785 = vsel %vm784, %v777, %v781
          %v786 = vand.u32 2147483647, %v776
          %vm787 = vcmp.eq.f32.partialorder %v786, 8.507059e+37
          %v788 = vand.u32 %v776, 2147483648
          %v789 = vor.u32 1.1754944e-38, %v788
          %v790 = vsel %vm787, %v789, %v785
          %v791 = vmul.f32 1.0, %v790
          %v792 = vmul.f32 %v771, %v791
          %v793 = vmul.f32 %v773, %v791
          %794 = vst [vmem:[%s376] sm:$0xff] %v792
          %795 = vst [vmem:[%s376 + $0x8] sm:$0xff] %v793
        $region64: #{attention_step.1} parent=43 // pred_fallthru
          _
        %p796 = scmp.lt.s32.totalorder %s27, 0
        %s797 = scalar_select %p796, %s27, 0
        %s798 = smul.addr %s797, 8
        %s799 = scalar_lea.vmem %s6, %s798
        %p800 = scmp.lt.s32.totalorder %s27, 0
        %s801 = scalar_select %p800, %s27, 0
        %s802 = smul.addr %s801, 8
        %s803 = scalar_lea.vmem %s7, %s802
        // Predicated region
        $region65: #{attention_step.1} parent=43 // pred_check
          %p804 = pneg %p191
        $region66: #{attention_step.1} parent=43 // pred_check_branch
          %806 = sbr.rel (%p804) target = $region68
        $region67: #{attention_step.1} parent=43 // pred_region
          _
        $region68: #{attention_step.1} parent=43 // pred_fallthru
          _
        // Predicated region
        $region69: #{attention_step.1} parent=43 // pred_check
          %p807 = pneg %p217
        $region70: #{attention_step.1} parent=43 // pred_check_branch
          %809 = sbr.rel (%p807) target = $region72
        $region71: #{attention_step.1} parent=43 // pred_region
          _
        $region72: #{attention_step.1} parent=43 // pred_fallthru
          _
        // Predicated region
        $region73: #{attention_step.1} parent=43 // pred_check
          %p810 = pneg %p191
        $region74: #{attention_step.1} parent=43 // pred_check_branch
          %812 = sbr.rel (%p810) target = $region76
        $region75: #{attention_step.1} parent=43 // pred_region
          %p813 = scmp.lt.s32.totalorder %s27, 0
          %s814 = scalar_select %p813, %s27, 0
          %s815 = smul.addr %s814, 8
          %s816 = scalar_lea.vmem %s6, %s815
        $region76: #{attention_step.1} parent=43 // pred_fallthru
          _
        // Predicated region
        $region77: #{attention_step.1} parent=43 // pred_check
          %p817 = pneg %p217
        $region78: #{attention_step.1} parent=43 // pred_check_branch
          %819 = sbr.rel (%p817) target = $region80
        $region79: #{attention_step.1} parent=43 // pred_region
          %p820 = scmp.lt.s32.totalorder %s27, 0
          %s821 = scalar_select %p820, %s27, 0
          %s822 = smul.addr %s821, 8
          %s823 = scalar_lea.vmem %s7, %s822
        $region80: #{attention_step.1} parent=43 // pred_fallthru
          _
      $region44: #{attention_step.1} parent=5 // pred_fallthru
        _
      %p824 = scmp.le.s32.totalorder 2, %s18
      // Predicated region
      $region81: #{attention_step.1} parent=5 // pred_check
        %p825 = pneg %p824
      $region82: #{attention_step.1} parent=5 // pred_check_branch
        %827 = sbr.rel (%p825) target = $region84
      $region83: #{attention_step.1} parent=5 // pred_region
        %s828 = ssub.s32 %s18, 2
      $region84: #{attention_step.1} parent=5 // pred_fallthru
        _
    $region6: #{attention_step.1} parent=1 // loop_footer
      %s22 = sadd.s32 1, %s18
    $region7: #{attention_step.1} parent=1 // loop_footer_branch
      %17 = sbr.rel target = $region3
    $region8: #{attention_step.1} parent=1 // loop_exit
      _
    %829 = vsyncpa [#allocation3], 1
    %s830 = scalar_lea.sflag [#allocation3], 1
    %831 = vsyncpa %s830, 1
    %832 = vsyncpa [#allocation5], 1

</llo_original>
